<compile_context>
chip_gen: v7x
topology: tpu7x:2x2x1
jax: 0.10.0
libtpu: 0.0.40
codegen_flags: <defaults>
</compile_context>

<pallas_src>
import functools

import jax
import jax.numpy as jnp
import numpy as np
from jax import lax
from jax.experimental import pallas as pl
from jax.experimental.pallas import tpu as pltpu


# --------------------------------------------------------------------------
# Pallas kernel: encoder -> symplectic pendulum step -> decoder (all fused)
# --------------------------------------------------------------------------
def _fully_informed_kernel(x_ref, sp_ref, out_ref, *, dt, g_over_l):
    x = x_ref[...]                       # [TB, observable_dim]
    x0 = x[:, 0:1]                       # encoder: X
    y0 = x[:, 4:5]                       # encoder: Y
    vel = x[:, 8:9]                      # encoder: angular velocity

    # theta0 = atan2(y0, x0) + pi/2, represented by its unit vector (c0, s0).
    r2 = x0 * x0 + y0 * y0
    inv_r = jnp.where(r2 > 0, lax.rsqrt(r2), 0.0)
    c0 = -y0 * inv_r                                # cos(theta0)
    s0 = jnp.where(r2 > 0, x0 * inv_r, 1.0)         # sin(theta0); atan2(0,0)=0 -> theta0=pi/2

    # Symplectic step: theta1 = theta0 + vel*dt  (angle-addition identity, no atan2),
    #                  theta_dot1 = vel - dt*(g/l)*sin(theta1).
    d = vel * dt
    cd = jnp.cos(d)
    sd = jnp.sin(d)
    c1 = c0 * cd - s0 * sd                          # cos(theta1) = new x
    s1 = s0 * cd + c0 * sd                          # sin(theta1) = new y
    theta_dot = vel - (dt * g_over_l) * s1

    # Decoder: [ y*sp | -x*sp | theta_dot*sp ]  -> [TB, 3*S]
    sp = sp_ref[...]                                # [1, S]
    out_ref[...] = jnp.concatenate(
        [s1 * sp, (-c1) * sp, theta_dot * sp], axis=-1)


# --------------------------------------------------------------------------
# Wrapper
# --------------------------------------------------------------------------
def fully_informed_forward(x, sampling_positions, dt, g=9.81, l=1.0,
                           block_b=512):
    """x: [B, observable_dim] observations. Returns [B, 3*S]."""
    B, D = x.shape
    sp = jnp.asarray(sampling_positions, x.dtype).reshape(1, -1)
    S = sp.shape[1]

    tb = B if B <= block_b else block_b             # full batch or 512-row tiles
    grid = (pl.cdiv(B, tb),)

    kernel = functools.partial(_fully_informed_kernel,
                               dt=float(dt), g_over_l=float(g) / float(l))

    return pl.pallas_call(
        kernel,
        out_shape=jax.ShapeDtypeStruct((B, 3 * S), x.dtype),
        grid=grid,
        in_specs=[pl.BlockSpec((tb, D), lambda i: (i, 0)),
                  pl.BlockSpec((1, S), lambda i: (0, 0))],
        out_specs=pl.BlockSpec((tb, 3 * S), lambda i: (i, 0)),
        compiler_params=pltpu.CompilerParams(
            dimension_semantics=("parallel",)),
    )(x, sp)


# --------------------------------------------------------------------------
# Pure-JAX reference (mirrors the PyTorch module op-for-op)
# --------------------------------------------------------------------------
def reference_forward(x, sampling_positions, dt, g=9.81, l=1.0):
    # InformedEncoder
    X0, Y0, V0 = x[:, 0], x[:, 4], x[:, 8]
    z = jnp.stack([X0, Y0, V0], axis=1)
    # InformedDynamics (k = 1)
    xx, yy, th_dot = z[:, 0], z[:, 1], z[:, 2]
    theta = jnp.arctan2(yy, xx) + jnp.pi / 2
    theta = theta + th_dot * dt
    th_dot = th_dot + dt * (-(g / l) * jnp.sin(theta))
    z = jnp.stack([jnp.cos(theta), jnp.sin(theta), th_dot], axis=1)
    # InformedDecoder on z.unsqueeze(0), then squeeze
    zz = z[None]                                    # (1, B, 3)
    sp = jnp.asarray(sampling_positions, x.dtype).reshape(1, -1)
    Xd = zz[:, :, 1:2] * sp
    Yd = zz[:, :, 0:1] * -sp
    Vd = zz[:, :, 2:3] * sp
    return jnp.squeeze(jnp.concatenate([Xd, Yd, Vd], axis=-1))


# --------------------------------------------------------------------------
if __name__ == "__main__":
    B, OBS_DIM = 2, 12
    DT, GRAVITY, L = 0.1, 9.81, 1.0
    SAMPLING_POSITIONS = [0.25, 0.5, 0.75, 1.0]      # 3 * 4 = observable_dim

    key = jax.random.PRNGKey(0)
    x = jax.random.normal(key, (B, OBS_DIM), jnp.float32)
    sp = jnp.asarray(SAMPLING_POSITIONS, jnp.float32)

    out = fully_informed_forward(x, sp, DT, GRAVITY, L)
    out = jax.block_until_ready(out)

    ref = reference_forward(x, sp, DT, GRAVITY, L)
    np.testing.assert_allclose(np.asarray(out), np.asarray(ref),
                               rtol=1e-4, atol=1e-4)
    assert out.shape == (B, 3 * len(SAMPLING_POSITIONS))

    print("KERNEL_OK")
</pallas_src>

<mosaic_0001>
module attributes {stable_mosaic.version = 11 : i64} {
  func.func @_fully_informed_kernel(%arg0: i32, %arg1: memref<2x12xf32, #tpu.memory_space<vmem>>, %arg2: memref<1x4xf32, #tpu.memory_space<vmem>>, %arg3: memref<2x12xf32, #tpu.memory_space<vmem>>) attributes {dimension_semantics = [#tpu.dimension_semantics<parallel>], iteration_bounds = array<i64: 1>, scalar_prefetch = 0 : i64, scratch_operands = 0 : i64, tpu.core_type = #tpu.core_type<tc>, window_params = [{transform_indices = @transform_0, window_bounds = array<i64: 2, 12>}, {pipeline_mode = #tpu.pipeline_mode<synchronous>, transform_indices = @transform_1, window_bounds = array<i64: 1, 4>}, {transform_indices = @transform_2, window_bounds = array<i64: 2, 12>}]} {
    %c0 = arith.constant 0 : index
    %c0_0 = arith.constant 0 : index
    %0 = vector.load %arg1[%c0, %c0_0] : memref<2x12xf32, #tpu.memory_space<vmem>>, vector<2x12xf32>
    %1 = vector.extract_strided_slice %0 {offsets = [0, 0], sizes = [2, 1], strides = [1, 1]} : vector<2x12xf32> to vector<2x1xf32>
    %2 = vector.extract_strided_slice %0 {offsets = [0, 4], sizes = [2, 1], strides = [1, 1]} : vector<2x12xf32> to vector<2x1xf32>
    %3 = vector.extract_strided_slice %0 {offsets = [0, 8], sizes = [2, 1], strides = [1, 1]} : vector<2x12xf32> to vector<2x1xf32>
    %4 = arith.mulf %1, %1 : vector<2x1xf32>
    %5 = arith.mulf %2, %2 : vector<2x1xf32>
    %6 = arith.addf %4, %5 : vector<2x1xf32>
    %cst = arith.constant 0.000000e+00 : f32
    %7 = vector.broadcast %cst : f32 to vector<2x1xf32>
    %8 = arith.cmpf ogt, %6, %7 : vector<2x1xf32>
    %9 = math.rsqrt %6 : vector<2x1xf32>
    %cst_1 = arith.constant 0.000000e+00 : f32
    %10 = vector.broadcast %cst_1 : f32 to vector<2x1xf32>
    %11 = arith.select %8, %9, %10 : vector<2x1xi1>, vector<2x1xf32>
    %cst_2 = arith.constant 0.000000e+00 : f32
    %12 = vector.broadcast %cst_2 : f32 to vector<2x1xf32>
    %13 = arith.subf %12, %2 : vector<2x1xf32>
    %14 = arith.mulf %13, %11 : vector<2x1xf32>
    %cst_3 = arith.constant 0.000000e+00 : f32
    %15 = vector.broadcast %cst_3 : f32 to vector<2x1xf32>
    %16 = arith.cmpf ogt, %6, %15 : vector<2x1xf32>
    %17 = arith.mulf %1, %11 : vector<2x1xf32>
    %cst_4 = arith.constant 1.000000e+00 : f32
    %18 = vector.broadcast %cst_4 : f32 to vector<2x1xf32>
    %19 = arith.select %16, %17, %18 : vector<2x1xi1>, vector<2x1xf32>
    %cst_5 = arith.constant 1.000000e-01 : f32
    %20 = vector.broadcast %cst_5 : f32 to vector<2x1xf32>
    %21 = arith.mulf %3, %20 : vector<2x1xf32>
    %22 = math.cos %21 : vector<2x1xf32>
    %23 = math.sin %21 : vector<2x1xf32>
    %24 = arith.mulf %14, %22 : vector<2x1xf32>
    %25 = arith.mulf %19, %23 : vector<2x1xf32>
    %26 = arith.subf %24, %25 : vector<2x1xf32>
    %27 = arith.mulf %19, %22 : vector<2x1xf32>
    %28 = arith.mulf %14, %23 : vector<2x1xf32>
    %29 = arith.addf %27, %28 : vector<2x1xf32>
    %cst_6 = arith.constant 9.810000e-01 : f32
    %30 = vector.broadcast %cst_6 : f32 to vector<2x1xf32>
    %31 = arith.mulf %30, %29 : vector<2x1xf32>
    %32 = arith.subf %3, %31 : vector<2x1xf32>
    %c0_7 = arith.constant 0 : index
    %c0_8 = arith.constant 0 : index
    %33 = vector.load %arg2[%c0_7, %c0_8] : memref<1x4xf32, #tpu.memory_space<vmem>>, vector<1x4xf32>
    %34 = vector.broadcast %29 : vector<2x1xf32> to vector<2x4xf32>
    %35 = vector.broadcast %33 : vector<1x4xf32> to vector<2x4xf32>
    %36 = arith.mulf %34, %35 : vector<2x4xf32>
    %cst_9 = arith.constant 0.000000e+00 : f32
    %37 = vector.broadcast %cst_9 : f32 to vector<2x1xf32>
    %38 = arith.subf %37, %26 : vector<2x1xf32>
    %39 = vector.broadcast %38 : vector<2x1xf32> to vector<2x4xf32>
    %40 = vector.broadcast %33 : vector<1x4xf32> to vector<2x4xf32>
    %41 = arith.mulf %39, %40 : vector<2x4xf32>
    %42 = vector.broadcast %32 : vector<2x1xf32> to vector<2x4xf32>
    %43 = vector.broadcast %33 : vector<1x4xf32> to vector<2x4xf32>
    %44 = arith.mulf %42, %43 : vector<2x4xf32>
    %45 = tpu.concatenate %36, %41, %44 in 1 : vector<2x4xf32>, vector<2x4xf32>, vector<2x4xf32> -> vector<2x12xf32>
    %c0_10 = arith.constant 0 : index
    %c0_11 = arith.constant 0 : index
    %46 = vector.load %arg3[%c0_10, %c0_11] : memref<2x12xf32, #tpu.memory_space<vmem>>, vector<2x12xf32>
    tpu.vector_store %arg3[%c0_10, %c0_11], %45 {strides = array<i32>} : memref<2x12xf32, #tpu.memory_space<vmem>>, vector<2x12xf32>,
    return
  }
  func.func @transform_0(%arg0: i32) -> (i32, i32) {
    %c0_i32 = arith.constant 0 : i32
    %c0_i32_0 = arith.constant 0 : i32
    return %arg0, %c0_i32 : i32, i32
  }
  func.func @transform_1(%arg0: i32) -> (i32, i32) {
    %c0_i32 = arith.constant 0 : i32
    %c0_i32_0 = arith.constant 0 : i32
    %c0_i32_1 = arith.constant 0 : i32
    return %c0_i32, %c0_i32_0 : i32, i32
  }
  func.func @transform_2(%arg0: i32) -> (i32, i32) {
    %c0_i32 = arith.constant 0 : i32
    %c0_i32_0 = arith.constant 0 : i32
    return %arg0, %c0_i32 : i32, i32
  }
}

</mosaic_0001>

<llo_original>
// kernel: tpu_custom_call.1
$region0: #{tpu_custom_call.1}
  #allocation0 [shape = 'u32[]', space=smem, size = 0x4, offset = 0x4, fixed_abs, tag = 'smem constant byte address 0x4 - core index']
  #allocation1 [shape = 'u32[144,128]{1,0:T(1,128)}', space=vmem, size = 0x12000, scoped, tag = 'internal scratch']
  %s0 = inlined_call_operand.hbm [shape: f32[2,12], index: 0, kind: input, shape index: {}]
  %s1 = inlined_call_operand.vmem [shape: f32[1,4], index: 1, kind: input, shape index: {}]
  %s2 = inlined_call_operand.hbm [shape: f32[2,12], index: 2, kind: output, shape index: {}]
  %s3 = sld [smem:[#allocation0]]
  $region22: #{tpu_custom_call.1} parent=0
    _
  %s5 = ssub.s32 1, %s3
  %s6 = scalar_select 0, %s5, %s3
  $region1: #{tpu_custom_call.1} parent=0
    #allocation2 [shape = 'u8[1024]{0}', space=vmem, size = 0x400, scoped, tag = 'input window, operand 0, single buffered']
    #allocation3 [shape = 's32[1]{0}', space=sflag, size = 0x4, scoped, tag = 'scoped memory for tpu_custom_call.1']
    #allocation4 [shape = 's32[1]{0}', space=sflag, size = 0x4, scoped, tag = 'scoped memory for tpu_custom_call.1']
    #allocation5 [shape = 'u8[1024]{0}', space=vmem, size = 0x400, scoped, tag = 'output window, operand 0, single buffered']
    %7 = vsyncpa [#allocation3], 0
    %8 = vsyncpa [#allocation4], 0
    // Predicated region
    $region2: #{tpu_custom_call.1} parent=1 // pred_check
      _
    $region3: #{tpu_custom_call.1} parent=1 // pred_check_branch
      %10 = sbr.rel (0) target = $region5
    $region4: #{tpu_custom_call.1} parent=1 // pred_region
      %s12 = ssub.s32 32, 32
      %13 = vsyncadd [#allocation3], %s12
      %s15 = sshll.u32 [#allocation2], 4
      %s16 = int_to_ptr.vmem [resolvable:$true] %s15
      %18 = dma.hbm_to_vmem [thread:$0]  %s0, 32, %s16, [#allocation3]
    $region5: #{tpu_custom_call.1} parent=1 // pred_fallthru
      _
    // Predicated region
    $region6: #{tpu_custom_call.1} parent=1 // pred_check
      _
    $region7: #{tpu_custom_call.1} parent=1 // pred_check_branch
      %20 = sbr.rel (0) target = $region9
    $region8: #{tpu_custom_call.1} parent=1 // pred_region
      _
    $region9: #{tpu_custom_call.1} parent=1 // pred_fallthru
      _
    // Predicated region
    $region10: #{tpu_custom_call.1} parent=1 // pred_check
      _
    $region11: #{tpu_custom_call.1} parent=1 // pred_check_branch
      %22 = sbr.rel (0) target = $region13
    $region12: #{tpu_custom_call.1} parent=1 // pred_region
      %23 = dma.done [#allocation3], 32
    $region13: #{tpu_custom_call.1} parent=1 // pred_fallthru
      _
    %v24 = vld [vmem:[#allocation2] sm:$0x3]
    %v25 = vmul.f32 %v24, %v24
    %27 = vrot.lane.b32.xlu0 %v25, 124
    %v28 = vpop.permute.xlu0 %27
    %v30 = vadd.f32 %v25, %v28
    %vm31 = vcmp.gt.f32.partialorder %v30, 0.0
    %v32 = vrsqrt.pop %v30
    %v33 = vsel %vm31, %v32, 0.0
    %v34 = vsub.f32 0.0, %v24
    %36 = vrot.lane.b32.xlu0 %v33, 4
    %v37 = vpop.permute.xlu0 %36
    %v39 = vmul.f32 %v34, %v37
    %v40 = vmul.f32 %v24, %v33
    %v41 = vsel %vm31, %v40, 1.0
    %v42 = vmul.f32 %v24, 0.1
    %v43 = vand.u32 2147483647, %v42
    %vm44 = vcmp.le.f32.partialorder %v43, 0.7853982
    %vm45 = vcmp.lt.s32.totalorder %v42, 0
    %v46 = vand.u32 %v42, 2139095040
    %v47 = vshrl.u32 %v46, 23
    %v48 = vsub.s32 %v47, 127
    %v49 = vand.u32 2147483647, %v42
    %v50 = vand.u32 %v49, 8388607
    %v51 = vor.u32 %v50, 8388608
    %v52 = vsub.s32 0, %v51
    %v53 = vadd.s32 %v48, 1
    %vm54 = vcmp.gt.s32.totalorder %v53, 0
    %v55 = vsel %vm54, %v53, 0
    %v56 = vshrl.u32 %v55, 5
    %v57 = vand.u32 %v55, 31
    %v58 = vsub.s32 32, %v57
    %v59 = vshrl.u32 683565275, %v58
    %v60 = vshll.u32 683565275, %v57
    %v61 = vshrl.u32 2475754826, %v58
    %v62 = vor.u32 %v60, %v61
    %v63 = vshll.u32 2475754826, %v57
    %v64 = vshrl.u32 2131351028, %v58
    %v65 = vor.u32 %v63, %v64
    %v66 = vshll.u32 2131351028, %v57
    %v67 = vshrl.u32 2102212464, %v58
    %v68 = vor.u32 %v66, %v67
    %v69 = vshll.u32 2102212464, %v57
    %v70 = vshrl.u32 920167782, %v58
    %v71 = vor.u32 %v69, %v70
    %v72 = vshll.u32 920167782, %v57
    %v73 = vshrl.u32 1326507024, %v58
    %v74 = vor.u32 %v72, %v73
    %vm75 = vcmp.lt.s32.totalorder %v56, 1
    %vm76 = vcmp.lt.s32.totalorder %v56, 2
    %vm77 = vcmp.lt.s32.totalorder %v56, 3
    %vm78 = vcmp.lt.s32.totalorder %v56, 4
    %v79 = vsel %vm75, %v59, %v62
    %v80 = vsel %vm78, %v68, 2102212464
    %v81 = vsel %vm77, %v65, %v80
    %v82 = vsel %vm76, %v79, %v81
    %v83 = vsel %vm75, %v62, %v65
    %v84 = vsel %vm78, %v71, 920167782
    %v85 = vsel %vm77, %v68, %v84
    %v86 = vsel %vm76, %v83, %v85
    %v87 = vsel %vm75, %v65, %v68
    %v88 = vsel %vm78, %v74, 1326507024
    %v89 = vsel %vm77, %v71, %v88
    %v90 = vsel %vm76, %v87, %v89
    %v91 = vshll.u32 %v51, 8
    %v92 = vmul.u32.u64.compose %v91, %v90
    %v93 = vextract.low.u32 %v92
    %v94 = vextract.high.u32 %v92
    %v95 = vmul.u32.u64.compose %v91, %v86
    %v96 = vextract.low.u32 %v95
    %v97 = vextract.high.u32 %v95
    %v98 = vmul.u32 %v91, %v82
    %v99 = vadd.s32 %v94, %v96
    %vm100 = vc.u32 %v94, %v96
    %v101 = vadd.s32 %v97, 1
    %v102 = vsel %vm100, %v101, %v97
    %v103 = vadd.s32 %v98, %v102
    %v104 = vadd.s32 %v103, 536870912
    %v105 = vshrl.u32 %v104, 30
    %v106 = vshll.u32 %v105, 30
    %v107 = vsub.s32 %v103, %v106
    %vm108 = vcmp.lt.s32.totalorder %v107, 0
    %v109 = vsub.s32 0, %v107
    %v110 = vsel %vm108, %v109, %v107
    %v111 = vclz %v110
    %v112 = vsub.s32 %v111, 2
    %vm113 = vcmp.gt.s32.totalorder 0, %v112
    %v114 = vsel %vm113, 0, %v112
    %v115 = vsub.s32 32, %v114
    %v116 = vshll.u32 %v107, %v114
    %v117 = vshrl.u32 %v99, %v115
    %v118 = vor.u32 %v116, %v117
    %v119 = vsub.s32 4294967266, %v114
    %v120 = vadd.s32 %v119, 127
    %v121 = vshll.u32 %v120, 23
    %v122 = vor.u32 4788187, %v121
    %v123 = vand.u32 2147483647, %v122
    %v125 = vcvt.s32.f32 %v118
    %v126 = vmul.f32 %v125, %v123
    %v127 = vxor.u32 %v126, 2147483648
    %v128 = vsel %vm45, %v127, %v126
    %v129 = vsub.s32 4, %v105
    %v130 = vsel %vm45, %v129, %v105
    %v131 = vsel %vm44, %v42, %v128
    %v132 = vsel %vm44, 0, %v130
    %v133 = vcosq.f32.pop %v131
    %v134 = vsinq.f32.pop %v131
    %vm135 = vweird.f32 %v42
    %v136 = vand.u32 %v132, 3
    %vm137 = vcmp.lt.s32.totalorder %v136, 2
    %vm138 = vcmp.eq.s32.totalorder %v136, 0
    %v139 = vxor.u32 %v134, 2147483648
    %v140 = vsel %vm138, %v133, %v139
    %vm141 = vcmp.eq.s32.totalorder %v136, 2
    %v142 = vxor.u32 %v133, 2147483648
    %v143 = vsel %vm141, %v142, %v134
    %v144 = vsel %vm137, %v140, %v143
    %v145 = vsel %vm135, nan, %v144
    %v146 = vand.u32 2147483647, %v42
    %vm147 = vcmp.le.f32.partialorder %v146, 0.7853982
    %vm148 = vcmp.lt.s32.totalorder %v42, 0
    %v149 = vand.u32 %v42, 2139095040
    %v150 = vshrl.u32 %v149, 23
    %v151 = vsub.s32 %v150, 127
    %v152 = vand.u32 2147483647, %v42
    %v153 = vand.u32 %v152, 8388607
    %v154 = vor.u32 %v153, 8388608
    %v155 = vsub.s32 0, %v154
    %v156 = vadd.s32 %v151, 1
    %vm157 = vcmp.gt.s32.totalorder %v156, 0
    %v158 = vsel %vm157, %v156, 0
    %v159 = vshrl.u32 %v158, 5
    %v160 = vand.u32 %v158, 31
    %v161 = vsub.s32 32, %v160
    %v162 = vshrl.u32 683565275, %v161
    %v163 = vshll.u32 683565275, %v160
    %v164 = vshrl.u32 2475754826, %v161
    %v165 = vor.u32 %v163, %v164
    %v166 = vshll.u32 2475754826, %v160
    %v167 = vshrl.u32 2131351028, %v161
    %v168 = vor.u32 %v166, %v167
    %v169 = vshll.u32 2131351028, %v160
    %v170 = vshrl.u32 2102212464, %v161
    %v171 = vor.u32 %v169, %v170
    %v172 = vshll.u32 2102212464, %v160
    %v173 = vshrl.u32 920167782, %v161
    %v174 = vor.u32 %v172, %v173
    %v175 = vshll.u32 920167782, %v160
    %v176 = vshrl.u32 1326507024, %v161
    %v177 = vor.u32 %v175, %v176
    %vm178 = vcmp.lt.s32.totalorder %v159, 1
    %vm179 = vcmp.lt.s32.totalorder %v159, 2
    %vm180 = vcmp.lt.s32.totalorder %v159, 3
    %vm181 = vcmp.lt.s32.totalorder %v159, 4
    %v182 = vsel %vm178, %v162, %v165
    %v183 = vsel %vm181, %v171, 2102212464
    %v184 = vsel %vm180, %v168, %v183
    %v185 = vsel %vm179, %v182, %v184
    %v186 = vsel %vm178, %v165, %v168
    %v187 = vsel %vm181, %v174, 920167782
    %v188 = vsel %vm180, %v171, %v187
    %v189 = vsel %vm179, %v186, %v188
    %v190 = vsel %vm178, %v168, %v171
    %v191 = vsel %vm181, %v177, 1326507024
    %v192 = vsel %vm180, %v174, %v191
    %v193 = vsel %vm179, %v190, %v192
    %v194 = vshll.u32 %v154, 8
    %v195 = vmul.u32.u64.compose %v194, %v193
    %v196 = vextract.low.u32 %v195
    %v197 = vextract.high.u32 %v195
    %v198 = vmul.u32.u64.compose %v194, %v189
    %v199 = vextract.low.u32 %v198
    %v200 = vextract.high.u32 %v198
    %v201 = vmul.u32 %v194, %v185
    %v202 = vadd.s32 %v197, %v199
    %vm203 = vc.u32 %v197, %v199
    %v204 = vadd.s32 %v200, 1
    %v205 = vsel %vm203, %v204, %v200
    %v206 = vadd.s32 %v201, %v205
    %v207 = vadd.s32 %v206, 536870912
    %v208 = vshrl.u32 %v207, 30
    %v209 = vshll.u32 %v208, 30
    %v210 = vsub.s32 %v206, %v209
    %vm211 = vcmp.lt.s32.totalorder %v210, 0
    %v212 = vsub.s32 0, %v210
    %v213 = vsel %vm211, %v212, %v210
    %v214 = vclz %v213
    %v215 = vsub.s32 %v214, 2
    %vm216 = vcmp.gt.s32.totalorder 0, %v215
    %v217 = vsel %vm216, 0, %v215
    %v218 = vsub.s32 32, %v217
    %v219 = vshll.u32 %v210, %v217
    %v220 = vshrl.u32 %v202, %v218
    %v221 = vor.u32 %v219, %v220
    %v222 = vsub.s32 4294967266, %v217
    %v223 = vadd.s32 %v222, 127
    %v224 = vshll.u32 %v223, 23
    %v225 = vor.u32 4788187, %v224
    %v226 = vand.u32 2147483647, %v225
    %v228 = vcvt.s32.f32 %v221
    %v229 = vmul.f32 %v228, %v226
    %v230 = vxor.u32 %v229, 2147483648
    %v231 = vsel %vm148, %v230, %v229
    %v232 = vsub.s32 4, %v208
    %v233 = vsel %vm148, %v232, %v208
    %v234 = vsel %vm147, %v42, %v231
    %v235 = vsel %vm147, 0, %v233
    %v236 = vcosq.f32.pop %v234
    %v237 = vsinq.f32.pop %v234
    %vm238 = vweird.f32 %v42
    %v239 = vadd.s32 %v235, 3
    %v240 = vand.u32 %v239, 3
    %vm241 = vcmp.lt.s32.totalorder %v240, 2
    %vm242 = vcmp.eq.s32.totalorder %v240, 0
    %v243 = vxor.u32 %v237, 2147483648
    %v244 = vsel %vm242, %v236, %v243
    %vm245 = vcmp.eq.s32.totalorder %v240, 2
    %v246 = vxor.u32 %v236, 2147483648
    %v247 = vsel %vm245, %v246, %v237
    %v248 = vsel %vm241, %v244, %v247
    %v249 = vsel %vm238, nan, %v248
    %251 = vrot.lane.b32.xlu0 %v145, 124
    %v252 = vpop.permute.xlu0 %251
    %v254 = vmul.f32 %v39, %v252
    %256 = vrot.lane.b32.xlu0 %v249, 120
    %v257 = vpop.permute.xlu0 %256
    %v259 = vmul.f32 %v41, %v257
    %261 = vrot.lane.b32.xlu0 %v259, 4
    %v262 = vpop.permute.xlu0 %261
    %v264 = vsub.f32 %v254, %v262
    %265 = vrot.lane.b32.xlu0 %v145, 120
    %v266 = vpop.permute.xlu0 %265
    %v268 = vmul.f32 %v41, %v266
    %269 = vrot.lane.b32.xlu0 %v249, 124
    %v270 = vpop.permute.xlu0 %269
    %v272 = vmul.f32 %v39, %v270
    %274 = vrot.lane.b32.xlu0 %v272, 124
    %v275 = vpop.permute.xlu0 %274
    %v277 = vadd.f32 %v268, %v275
    %v278 = vmul.f32 %v277, 0.981
    %280 = vrot.lane.b32.xlu0 %v278, 8
    %v281 = vpop.permute.xlu0 %280
    %v283 = vsub.f32 %v24, %v281
    %v284 = vld [vmem:[%s1] sm:$0x1]
    %286 = vset.pattern.permute.xlu0 0
    %287 = vperm.xlu0 %286, %v277
    %v288 = vpop.permute.xlu0 %287
    %v291 = vlaneseq
    %v292 = vshrl.u32 %v291, 7
    %v293 = vsub.s32 0, %v292
    %v294 = vrot.slane %v284, %v293
    %v296 = vmul.f32 %v288, %v294
    %v297 = vsub.f32 0.0, %v264
    %299 = vset.pattern.permute.xlu0 4
    %300 = vperm.xlu0 %299, %v297
    %v301 = vpop.permute.xlu0 %300
    %v303 = vmul.f32 %v301, %v294
    %305 = vset.pattern.permute.xlu0 8
    %306 = vperm.xlu0 %305, %v283
    %v307 = vpop.permute.xlu0 %306
    %v309 = vmul.f32 %v307, %v294
    %311 = vrot.lane.b32.xlu0 %v303, 4
    %v312 = vpop.permute.xlu0 %311
    %315 = vrot.lane.b32.xlu0 %v309, 8
    %v316 = vpop.permute.xlu0 %315
    %vm318 = vcmask 31744
    %v319 = vsel %vm318, %v296, %v312
    %vm320 = vcmask 64512
    %v321 = vsel %vm320, %v319, %v316
    %vm322 = vcmask 91136
    %323 = vst.msk [vmem:[#allocation5] sm:$0x3] %vm322, %v321
    // Predicated region
    $region14: #{tpu_custom_call.1} parent=1 // pred_check
      _
    $region15: #{tpu_custom_call.1} parent=1 // pred_check_branch
      %325 = sbr.rel (0) target = $region17
    $region16: #{tpu_custom_call.1} parent=1 // pred_region
      %s327 = ssub.s32 32, 32
      %328 = vsyncadd [#allocation4], %s327
      %s330 = sshll.u32 [#allocation5], 4
      %s331 = int_to_ptr.vmem [resolvable:$true] %s330
      %333 = dma.vmem_to_hbm [thread:$0]  %s331, 32, %s2, [#allocation4]
    $region17: #{tpu_custom_call.1} parent=1 // pred_fallthru
      _
    // Predicated region
    $region18: #{tpu_custom_call.1} parent=1 // pred_check
      _
    $region19: #{tpu_custom_call.1} parent=1 // pred_check_branch
      %335 = sbr.rel (0) target = $region21
    $region20: #{tpu_custom_call.1} parent=1 // pred_region
      %336 = dma.done [#allocation4], 32
    $region21: #{tpu_custom_call.1} parent=1 // pred_fallthru
      _
    %337 = vsyncpa [#allocation3], 1
    %338 = vsyncpa [#allocation4], 1

</llo_original>
